<compile_context>
chip_gen: v7x
topology: tpu7x:2x2x1
jax: 0.10.0
libtpu: 0.0.40
codegen_flags: <defaults>
</compile_context>

<pallas_src>
import functools

import jax
import jax.numpy as jnp
from jax.experimental import pallas as pl
from jax.experimental.pallas import tpu as pltpu


def _bce_kernel(preds_ref, target_ref, out_ref, acc_ref, *,
                total_rows, inv_denom, need_mask):
    i = pl.program_id(0)

    @pl.when(i == 0)
    def _init():
        acc_ref[...] = jnp.zeros_like(acc_ref)

    x = preds_ref[...].astype(jnp.float32)
    t = target_ref[...].astype(jnp.float32)

    # torch semantics: sigmoid, then BCELoss with log terms clamped at -100.
    p = jax.nn.sigmoid(x)
    log_p = jnp.maximum(jnp.log(p), -100.0)
    log_1mp = jnp.maximum(jnp.log(1.0 - p), -100.0)
    bce = -(t * log_p + (1.0 - t) * log_1mp)

    if need_mask:
        # Zero contributions from out-of-range rows of the ragged last tile.
        tb = bce.shape[0]
        row = i * tb + jax.lax.broadcasted_iota(jnp.int32, bce.shape, 0)
        bce = jnp.where(row < total_rows, bce, 0.0)

    acc_ref[...] += bce

    @pl.when(i == pl.num_programs(0) - 1)
    def _finalize():
        # One full reduce + constant multiply, stored once as an SMEM scalar.
        out_ref[0, 0] = jnp.sum(acc_ref[...]) * inv_denom


def keras_binary_crossentropy(preds: jax.Array, target: jax.Array,
                              *, block_rows: int | None = None) -> jax.Array:
    """Pallas TPU implementation of KerasBinaryCrossentropy.forward."""
    assert preds.shape == target.shape and preds.ndim == 2
    B, C = preds.shape

    # Tile the batch dimension. Blocks must have a sublane dim divisible by 8
    # unless they cover the full batch; cap at 512 rows (good HBM-roofline tile
    # for small C, and tiny vs. every chip's scoped VMEM budget).
    if block_rows is None:
        block_rows = B if B <= 512 else 512
    block_rows = min(block_rows, B)
    if block_rows != B:
        block_rows = max(8, (block_rows // 8) * 8)
    num_tiles = pl.cdiv(B, block_rows)

    kernel = functools.partial(
        _bce_kernel,
        total_rows=B,
        inv_denom=1.0 / float(B * C),
        need_mask=(B % block_rows != 0),
    )

    nbytes = lambda a: a.size * a.dtype.itemsize
    cost = pl.CostEstimate(
        flops=10 * B * C,
        transcendentals=4 * B * C,          # exp + reciprocal + 2 logs per element
        bytes_accessed=nbytes(preds) + nbytes(target) + 4,
    )

    out = pl.pallas_call(
        kernel,
        out_shape=jax.ShapeDtypeStruct((1, 1), jnp.float32),
        grid=(num_tiles,),
        in_specs=[
            pl.BlockSpec((block_rows, C), lambda i: (i, 0)),
            pl.BlockSpec((block_rows, C), lambda i: (i, 0)),
        ],
        # Scalar result lives in SMEM (no lane-sparse masked VMEM store).
        out_specs=pl.BlockSpec(memory_space=pltpu.MemorySpace.SMEM),
        scratch_shapes=[pltpu.VMEM((block_rows, C), jnp.float32)],
        compiler_params=pltpu.CompilerParams(
            dimension_semantics=("arbitrary",),   # resident accumulator axis
        ),
        cost_estimate=cost,
    )(preds, target)   # native dtypes; cast to f32 happens inside the kernel
    return out[0, 0]


def _reference(preds, target):
    # Pure-JAX reference mirroring the PyTorch loop exactly.
    p = jax.nn.sigmoid(preds.astype(jnp.float32))
    t = target.astype(jnp.float32)
    log_p = jnp.maximum(jnp.log(p), -100.0)
    log_1mp = jnp.maximum(jnp.log(1.0 - p), -100.0)
    per_elem = -(t * log_p + (1.0 - t) * log_1mp)
    per_class_mean = per_elem.mean(axis=0)          # mean over batch per class
    return per_class_mean.sum() / preds.shape[1]    # average over classes


if __name__ == "__main__":
    key = jax.random.PRNGKey(0)
    k1, k2 = jax.random.split(key)

    # MIMIC-III phenotyping: 25 labels; small batch for the self-test.
    B, NUM_CLASSES = 50, 25
    preds = jax.random.normal(k1, (B, NUM_CLASSES), dtype=jnp.float32) * 3.0
    target = (jax.random.uniform(k2, (B, NUM_CLASSES)) > 0.5).astype(jnp.float32)

    ref = _reference(preds, target)

    # Default path: whole batch in one block (B <= 512).
    loss_single = keras_binary_crossentropy(preds, target)
    jax.block_until_ready(loss_single)
    assert jnp.allclose(loss_single, ref, rtol=1e-5, atol=1e-5), (loss_single, ref)

    # Tiled path with a ragged last tile: exercises grid, accumulator and mask.
    loss_tiled = keras_binary_crossentropy(preds, target, block_rows=16)
    jax.block_until_ready(loss_tiled)
    assert jnp.allclose(loss_tiled, ref, rtol=1e-5, atol=1e-5), (loss_tiled, ref)

    print("KERNEL_OK")
</pallas_src>

<mosaic_0001>
module attributes {stable_mosaic.version = 11 : i64} {
  func.func @_bce_kernel(%arg0: i32, %arg1: memref<50x25xf32, #tpu.memory_space<vmem>>, %arg2: memref<50x25xf32, #tpu.memory_space<vmem>>, %arg3: memref<1x1xf32, #tpu.memory_space<smem>>, %arg4: memref<50x25xf32, #tpu.memory_space<vmem>>) attributes {dimension_semantics = [#tpu.dimension_semantics<arbitrary>], iteration_bounds = array<i64: 1>, scalar_prefetch = 0 : i64, scratch_operands = 1 : i64, tpu.core_type = #tpu.core_type<tc>, window_params = [{transform_indices = @transform_0, window_bounds = array<i64: 50, 25>}, {transform_indices = @transform_1, window_bounds = array<i64: 50, 25>}, {transform_indices = @transform_2, window_bounds = array<i64: 1, 1>}]} {
    %c0_i32 = arith.constant 0 : i32
    %0 = arith.cmpi eq, %arg0, %c0_i32 : i32
    %1 = arith.extui %0 : i1 to i32
    %c0_i32_0 = arith.constant 0 : i32
    %2 = arith.cmpi ne, %1, %c0_i32_0 : i32
    scf.if %2 {
      %cst_15 = arith.constant 0.000000e+00 : f32
      %31 = vector.broadcast %cst_15 : f32 to vector<50x25xf32>
      %c0_16 = arith.constant 0 : index
      %c0_17 = arith.constant 0 : index
      %32 = vector.load %arg4[%c0_16, %c0_17] : memref<50x25xf32, #tpu.memory_space<vmem>>, vector<50x25xf32>
      tpu.vector_store %arg4[%c0_16, %c0_17], %31 {strides = array<i32>} : memref<50x25xf32, #tpu.memory_space<vmem>>, vector<50x25xf32>,
    } else {
    }
    %c0 = arith.constant 0 : index
    %c0_1 = arith.constant 0 : index
    %3 = vector.load %arg1[%c0, %c0_1] : memref<50x25xf32, #tpu.memory_space<vmem>>, vector<50x25xf32>
    %c0_2 = arith.constant 0 : index
    %c0_3 = arith.constant 0 : index
    %4 = vector.load %arg2[%c0_2, %c0_3] : memref<50x25xf32, #tpu.memory_space<vmem>>, vector<50x25xf32>
    %5 = arith.negf %3 : vector<50x25xf32>
    %6 = math.exp %5 : vector<50x25xf32>
    %cst = arith.constant 1.000000e+00 : f32
    %7 = vector.broadcast %cst : f32 to vector<50x25xf32>
    %8 = arith.addf %7, %6 : vector<50x25xf32>
    %9 = arith.divf %7, %8 : vector<50x25xf32>
    %10 = math.log %9 : vector<50x25xf32>
    %cst_4 = arith.constant -1.000000e+02 : f32
    %11 = vector.broadcast %cst_4 : f32 to vector<50x25xf32>
    %12 = arith.maximumf %10, %11 : vector<50x25xf32>
    %cst_5 = arith.constant 1.000000e+00 : f32
    %13 = vector.broadcast %cst_5 : f32 to vector<50x25xf32>
    %14 = arith.subf %13, %9 : vector<50x25xf32>
    %15 = math.log %14 : vector<50x25xf32>
    %cst_6 = arith.constant -1.000000e+02 : f32
    %16 = vector.broadcast %cst_6 : f32 to vector<50x25xf32>
    %17 = arith.maximumf %15, %16 : vector<50x25xf32>
    %18 = arith.mulf %4, %12 : vector<50x25xf32>
    %cst_7 = arith.constant 1.000000e+00 : f32
    %19 = vector.broadcast %cst_7 : f32 to vector<50x25xf32>
    %20 = arith.subf %19, %4 : vector<50x25xf32>
    %21 = arith.mulf %20, %17 : vector<50x25xf32>
    %22 = arith.addf %18, %21 : vector<50x25xf32>
    %cst_8 = arith.constant 0.000000e+00 : f32
    %23 = vector.broadcast %cst_8 : f32 to vector<50x25xf32>
    %24 = arith.subf %23, %22 : vector<50x25xf32>
    %c0_9 = arith.constant 0 : index
    %c0_10 = arith.constant 0 : index
    %25 = vector.load %arg4[%c0_9, %c0_10] : memref<50x25xf32, #tpu.memory_space<vmem>>, vector<50x25xf32>
    %26 = arith.addf %25, %24 : vector<50x25xf32>
    %c0_11 = arith.constant 0 : index
    %c0_12 = arith.constant 0 : index
    %27 = vector.load %arg4[%c0_11, %c0_12] : memref<50x25xf32, #tpu.memory_space<vmem>>, vector<50x25xf32>
    tpu.vector_store %arg4[%c0_11, %c0_12], %26 {strides = array<i32>} : memref<50x25xf32, #tpu.memory_space<vmem>>, vector<50x25xf32>,
    %c0_i32_13 = arith.constant 0 : i32
    %28 = arith.cmpi eq, %arg0, %c0_i32_13 : i32
    %29 = arith.extui %28 : i1 to i32
    %c0_i32_14 = arith.constant 0 : i32
    %30 = arith.cmpi ne, %29, %c0_i32_14 : i32
    scf.if %30 {
      %c0_15 = arith.constant 0 : index
      %c0_16 = arith.constant 0 : index
      %31 = vector.load %arg4[%c0_15, %c0_16] : memref<50x25xf32, #tpu.memory_space<vmem>>, vector<50x25xf32>
      %32 = vector.shape_cast %31 : vector<50x25xf32> to vector<1x50x25xf32>
      %cst_17 = arith.constant dense<0.000000e+00> : vector<1xf32>
      %33 = vector.multi_reduction <add>, %32, %cst_17 [1, 2] : vector<1x50x25xf32> to vector<1xf32>
      %34 = vector.shape_cast %33 : vector<1xf32> to vector<1x1x1xf32>
      %35 = vector.extract %34[0, 0, 0] : f32 from vector<1x1x1xf32>
      %cst_18 = arith.constant 8.000000e-04 : f32
      %36 = arith.mulf %35, %cst_18 : f32
      %c0_19 = arith.constant 0 : index
      %c0_20 = arith.constant 0 : index
      %37 = memref.load %arg3[%c0_19, %c0_20] : memref<1x1xf32, #tpu.memory_space<smem>>
      memref.store %36, %arg3[%c0_19, %c0_20] : memref<1x1xf32, #tpu.memory_space<smem>>
    } else {
    }
    return
  }
  func.func @transform_0(%arg0: i32) -> (i32, i32) {
    %c0_i32 = arith.constant 0 : i32
    %c0_i32_0 = arith.constant 0 : i32
    return %arg0, %c0_i32 : i32, i32
  }
  func.func @transform_1(%arg0: i32) -> (i32, i32) {
    %c0_i32 = arith.constant 0 : i32
    %c0_i32_0 = arith.constant 0 : i32
    return %arg0, %c0_i32 : i32, i32
  }
  func.func @transform_2(%arg0: i32) -> (i32, i32) {
    %c0_i32 = arith.constant 0 : i32
    %c0_i32_0 = arith.constant 0 : i32
    %c0_i32_1 = arith.constant 0 : i32
    return %c0_i32, %c0_i32_0 : i32, i32
  }
}

</mosaic_0001>

<llo_original>
// kernel: tpu_custom_call.1
$region0: #{tpu_custom_call.1}
  #allocation0 [shape = 'u32[]', space=smem, size = 0x4, offset = 0x4, fixed_abs, tag = 'smem constant byte address 0x4 - core index']
  #allocation1 [shape = 'u32[144,128]{1,0:T(1,128)}', space=vmem, size = 0x12000, scoped, tag = 'internal scratch']
  #allocation2 [shape = 'f32[50,25]{1,0:T(8,128)}', space=vmem, size = 0x7000, scoped, tag = 'scratch operand']
  %s0 = inlined_call_operand.vmem [shape: f32[50,25], index: 0, kind: input, shape index: {}]
  %s1 = inlined_call_operand.vmem [shape: f32[50,25], index: 1, kind: input, shape index: {}]
  %s2 = inlined_call_operand.hbm [shape: f32[1,1], index: 2, kind: output, shape index: {}]
  %s3 = sld [smem:[#allocation0]]
  $region26: #{tpu_custom_call.1} parent=0
    _
  %s5 = ssub.s32 1, %s3
  %s6 = scalar_select 0, %s5, %s3
  $region1: #{tpu_custom_call.1} parent=0
    #allocation3 [shape = 'u8[512]{0}', space=smem, size = 0x200, scoped, tag = 'output window, operand 0, single buffered']
    #allocation4 [shape = 's32[1]{0}', space=sflag, size = 0x4, scoped, tag = 'scoped memory for tpu_custom_call.1']
    %7 = vsyncpa [#allocation4], 0
    // Predicated region
    $region2: #{tpu_custom_call.1} parent=1 // pred_check
      _
    $region3: #{tpu_custom_call.1} parent=1 // pred_check_branch
      %9 = sbr.rel (0) target = $region5
    $region4: #{tpu_custom_call.1} parent=1 // pred_region
      _
    $region5: #{tpu_custom_call.1} parent=1 // pred_fallthru
      _
    // Predicated region
    $region6: #{tpu_custom_call.1} parent=1 // pred_check
      _
    $region7: #{tpu_custom_call.1} parent=1 // pred_check_branch
      %11 = sbr.rel (0) target = $region9
    $region8: #{tpu_custom_call.1} parent=1 // pred_region
      _
    $region9: #{tpu_custom_call.1} parent=1 // pred_fallthru
      _
    %p12 = scmp.eq.s32.totalorder 0, 0
    // Predicated region
    $region10: #{tpu_custom_call.1} parent=1 // pred_check
      %p13 = pneg %p12
    $region11: #{tpu_custom_call.1} parent=1 // pred_check_branch
      %15 = sbr.rel (%p13) target = $region13
    $region12: #{tpu_custom_call.1} parent=1 // pred_region
      %vm16 = vcmask 203776
      %17 = vst.msk [vmem:[#allocation2] sm:$0xff] %vm16, 0.0
      %18 = vst.msk [vmem:[#allocation2 + $0x8] sm:$0xff] %vm16, 0.0
      %19 = vst.msk [vmem:[#allocation2 + $0x10] sm:$0xff] %vm16, 0.0
      %20 = vst.msk [vmem:[#allocation2 + $0x18] sm:$0xff] %vm16, 0.0
      %21 = vst.msk [vmem:[#allocation2 + $0x20] sm:$0xff] %vm16, 0.0
      %22 = vst.msk [vmem:[#allocation2 + $0x28] sm:$0xff] %vm16, 0.0
      %vm23 = vcmask 197632
      %24 = vst.msk [vmem:[#allocation2 + $0x30] sm:$0x3] %vm23, 0.0
    $region13: #{tpu_custom_call.1} parent=1 // pred_fallthru
      _
    %v25 = vld [vmem:[%s0] sm:$0xff]
    %v26 = vld [vmem:[%s0 + $0x8] sm:$0xff]
    %v27 = vld [vmem:[%s0 + $0x10] sm:$0xff]
    %v28 = vld [vmem:[%s0 + $0x18] sm:$0xff]
    %v29 = vld [vmem:[%s0 + $0x20] sm:$0xff]
    %v30 = vld [vmem:[%s0 + $0x28] sm:$0xff]
    %v31 = vld [vmem:[%s0 + $0x30] sm:$0x3]
    %v32 = vld [vmem:[%s1] sm:$0xff]
    %v33 = vld [vmem:[%s1 + $0x8] sm:$0xff]
    %v34 = vld [vmem:[%s1 + $0x10] sm:$0xff]
    %v35 = vld [vmem:[%s1 + $0x18] sm:$0xff]
    %v36 = vld [vmem:[%s1 + $0x20] sm:$0xff]
    %v37 = vld [vmem:[%s1 + $0x28] sm:$0xff]
    %v38 = vld [vmem:[%s1 + $0x30] sm:$0x3]
    %v39 = vxor.u32 %v25, 2147483648
    %v40 = vxor.u32 %v26, 2147483648
    %v41 = vxor.u32 %v27, 2147483648
    %v42 = vxor.u32 %v28, 2147483648
    %v43 = vxor.u32 %v29, 2147483648
    %v44 = vxor.u32 %v30, 2147483648
    %v45 = vxor.u32 %v31, 2147483648
    %v46 = vmul.f32 %v39, 1.442695
    %v47 = vpow.pop %v46
    %v48 = vmul.f32 %v40, 1.442695
    %v49 = vpow.pop %v48
    %v50 = vmul.f32 %v41, 1.442695
    %v51 = vpow.pop %v50
    %v52 = vmul.f32 %v42, 1.442695
    %v53 = vpow.pop %v52
    %v54 = vmul.f32 %v43, 1.442695
    %v55 = vpow.pop %v54
    %v56 = vmul.f32 %v44, 1.442695
    %v57 = vpow.pop %v56
    %v58 = vmul.f32 %v45, 1.442695
    %v59 = vpow.pop %v58
    %v60 = vadd.f32 %v47, 1.0
    %v61 = vadd.f32 %v49, 1.0
    %v62 = vadd.f32 %v51, 1.0
    %v63 = vadd.f32 %v53, 1.0
    %v64 = vadd.f32 %v55, 1.0
    %v65 = vadd.f32 %v57, 1.0
    %v66 = vadd.f32 %v59, 1.0
    %v67 = vrcp.pop %v60
    %v68 = vmul.f32 1.0, %v67
    %v69 = vrcp.pop %v61
    %v70 = vmul.f32 1.0, %v69
    %v71 = vrcp.pop %v62
    %v72 = vmul.f32 1.0, %v71
    %v73 = vrcp.pop %v63
    %v74 = vmul.f32 1.0, %v73
    %v75 = vrcp.pop %v64
    %v76 = vmul.f32 1.0, %v75
    %v77 = vrcp.pop %v65
    %v78 = vmul.f32 1.0, %v77
    %v79 = vrcp.pop %v66
    %v80 = vmul.f32 1.0, %v79
    %v81 = vlog2.pop %v68
    %v82 = vmul.f32 %v81, 0.6931472
    %v83 = vlog2.pop %v70
    %v84 = vmul.f32 %v83, 0.6931472
    %v85 = vlog2.pop %v72
    %v86 = vmul.f32 %v85, 0.6931472
    %v87 = vlog2.pop %v74
    %v88 = vmul.f32 %v87, 0.6931472
    %v89 = vlog2.pop %v76
    %v90 = vmul.f32 %v89, 0.6931472
    %v91 = vlog2.pop %v78
    %v92 = vmul.f32 %v91, 0.6931472
    %v93 = vlog2.pop %v80
    %v94 = vmul.f32 %v93, 0.6931472
    %v95 = vmax.f32 %v82, -100.0
    %v96 = vmax.f32 %v84, -100.0
    %v97 = vmax.f32 %v86, -100.0
    %v98 = vmax.f32 %v88, -100.0
    %v99 = vmax.f32 %v90, -100.0
    %v100 = vmax.f32 %v92, -100.0
    %v101 = vmax.f32 %v94, -100.0
    %v102 = vsub.f32 1.0, %v68
    %v103 = vsub.f32 1.0, %v70
    %v104 = vsub.f32 1.0, %v72
    %v105 = vsub.f32 1.0, %v74
    %v106 = vsub.f32 1.0, %v76
    %v107 = vsub.f32 1.0, %v78
    %v108 = vsub.f32 1.0, %v80
    %v109 = vlog2.pop %v102
    %v110 = vmul.f32 %v109, 0.6931472
    %v111 = vlog2.pop %v103
    %v112 = vmul.f32 %v111, 0.6931472
    %v113 = vlog2.pop %v104
    %v114 = vmul.f32 %v113, 0.6931472
    %v115 = vlog2.pop %v105
    %v116 = vmul.f32 %v115, 0.6931472
    %v117 = vlog2.pop %v106
    %v118 = vmul.f32 %v117, 0.6931472
    %v119 = vlog2.pop %v107
    %v120 = vmul.f32 %v119, 0.6931472
    %v121 = vlog2.pop %v108
    %v122 = vmul.f32 %v121, 0.6931472
    %v123 = vmax.f32 %v110, -100.0
    %v124 = vmax.f32 %v112, -100.0
    %v125 = vmax.f32 %v114, -100.0
    %v126 = vmax.f32 %v116, -100.0
    %v127 = vmax.f32 %v118, -100.0
    %v128 = vmax.f32 %v120, -100.0
    %v129 = vmax.f32 %v122, -100.0
    %v130 = vmul.f32 %v32, %v95
    %v131 = vmul.f32 %v33, %v96
    %v132 = vmul.f32 %v34, %v97
    %v133 = vmul.f32 %v35, %v98
    %v134 = vmul.f32 %v36, %v99
    %v135 = vmul.f32 %v37, %v100
    %v136 = vmul.f32 %v38, %v101
    %v137 = vsub.f32 1.0, %v32
    %v138 = vsub.f32 1.0, %v33
    %v139 = vsub.f32 1.0, %v34
    %v140 = vsub.f32 1.0, %v35
    %v141 = vsub.f32 1.0, %v36
    %v142 = vsub.f32 1.0, %v37
    %v143 = vsub.f32 1.0, %v38
    %v144 = vmul.f32 %v137, %v123
    %v145 = vmul.f32 %v138, %v124
    %v146 = vmul.f32 %v139, %v125
    %v147 = vmul.f32 %v140, %v126
    %v148 = vmul.f32 %v141, %v127
    %v149 = vmul.f32 %v142, %v128
    %v150 = vmul.f32 %v143, %v129
    %v151 = vadd.f32 %v130, %v144
    %v152 = vadd.f32 %v131, %v145
    %v153 = vadd.f32 %v132, %v146
    %v154 = vadd.f32 %v133, %v147
    %v155 = vadd.f32 %v134, %v148
    %v156 = vadd.f32 %v135, %v149
    %v157 = vadd.f32 %v136, %v150
    %v158 = vsub.f32 0.0, %v151
    %v159 = vsub.f32 0.0, %v152
    %v160 = vsub.f32 0.0, %v153
    %v161 = vsub.f32 0.0, %v154
    %v162 = vsub.f32 0.0, %v155
    %v163 = vsub.f32 0.0, %v156
    %v164 = vsub.f32 0.0, %v157
    %v165 = vld [vmem:[#allocation2] sm:$0xff]
    %v166 = vld [vmem:[#allocation2 + $0x8] sm:$0xff]
    %v167 = vld [vmem:[#allocation2 + $0x10] sm:$0xff]
    %v168 = vld [vmem:[#allocation2 + $0x18] sm:$0xff]
    %v169 = vld [vmem:[#allocation2 + $0x20] sm:$0xff]
    %v170 = vld [vmem:[#allocation2 + $0x28] sm:$0xff]
    %v171 = vld [vmem:[#allocation2 + $0x30] sm:$0x3]
    %v172 = vadd.f32 %v165, %v158
    %v173 = vadd.f32 %v166, %v159
    %v174 = vadd.f32 %v167, %v160
    %v175 = vadd.f32 %v168, %v161
    %v176 = vadd.f32 %v169, %v162
    %v177 = vadd.f32 %v170, %v163
    %v178 = vadd.f32 %v171, %v164
    %vm179 = vcmask 203776
    %180 = vst.msk [vmem:[#allocation2] sm:$0xff] %vm179, %v172
    %181 = vst.msk [vmem:[#allocation2 + $0x8] sm:$0xff] %vm179, %v173
    %182 = vst.msk [vmem:[#allocation2 + $0x10] sm:$0xff] %vm179, %v174
    %183 = vst.msk [vmem:[#allocation2 + $0x18] sm:$0xff] %vm179, %v175
    %184 = vst.msk [vmem:[#allocation2 + $0x20] sm:$0xff] %vm179, %v176
    %185 = vst.msk [vmem:[#allocation2 + $0x28] sm:$0xff] %vm179, %v177
    %vm186 = vcmask 197632
    %187 = vst.msk [vmem:[#allocation2 + $0x30] sm:$0x3] %vm186, %v178
    // Predicated region
    $region14: #{tpu_custom_call.1} parent=1 // pred_check
      %p188 = pneg %p12
    $region15: #{tpu_custom_call.1} parent=1 // pred_check_branch
      %190 = sbr.rel (%p188) target = $region17
    $region16: #{tpu_custom_call.1} parent=1 // pred_region
      %v191 = vld [vmem:[#allocation2] sm:$0xff]
      %v192 = vld [vmem:[#allocation2 + $0x8] sm:$0xff]
      %v193 = vld [vmem:[#allocation2 + $0x10] sm:$0xff]
      %v194 = vld [vmem:[#allocation2 + $0x18] sm:$0xff]
      %v195 = vld [vmem:[#allocation2 + $0x20] sm:$0xff]
      %v196 = vld [vmem:[#allocation2 + $0x28] sm:$0xff]
      %v197 = vld [vmem:[#allocation2 + $0x30] sm:$0x3]
      %v198 = vsel %vm179, %v191, 0.0
      %v199 = vsel %vm179, %v192, 0.0
      %v200 = vadd.f32 %v198, %v199
      %v201 = vsel %vm179, %v193, 0.0
      %v202 = vadd.f32 %v200, %v201
      %v203 = vsel %vm179, %v194, 0.0
      %v204 = vadd.f32 %v202, %v203
      %v205 = vsel %vm179, %v195, 0.0
      %v206 = vadd.f32 %v204, %v205
      %v207 = vsel %vm179, %v196, 0.0
      %v208 = vadd.f32 %v206, %v207
      %v209 = vsel %vm186, %v197, 0.0
      %v210 = vadd.f32 %v208, %v209
      %211 = vadd.xlane.f32.xlu0 %v210
      %v212 = vpop.xlane.xlu0 %211
      %v213 = vrot.slane %v212, 4
      %v214 = vadd.f32 %v212, %v213
      %v215 = vrot.slane %v214, 2
      %v216 = vadd.f32 %v214, %v215
      %v217 = vrot.slane %v216, 1
      %v218 = vadd.f32 %v216, %v217
      %s219 = vtos %v218
      %s220 = smul.f32 %s219, 0.0008
      %s221 = scalar_lea.smem [#allocation3], 0
      %222 = sst [smem:[%s221]] %s220
    $region17: #{tpu_custom_call.1} parent=1 // pred_fallthru
      _
    // Predicated region
    $region18: #{tpu_custom_call.1} parent=1 // pred_check
      _
    $region19: #{tpu_custom_call.1} parent=1 // pred_check_branch
      %224 = sbr.rel (0) target = $region21
    $region20: #{tpu_custom_call.1} parent=1 // pred_region
      %s226 = ssub.s32 16, 16
      %227 = vsyncadd [#allocation4], %s226
      %230 = dma.smem_to_hbm [#allocation3], 16, %s2, [#allocation4]
    $region21: #{tpu_custom_call.1} parent=1 // pred_fallthru
      _
    // Predicated region
    $region22: #{tpu_custom_call.1} parent=1 // pred_check
      _
    $region23: #{tpu_custom_call.1} parent=1 // pred_check_branch
      %232 = sbr.rel (0) target = $region25
    $region24: #{tpu_custom_call.1} parent=1 // pred_region
      %233 = dma.done [#allocation4], 16
    $region25: #{tpu_custom_call.1} parent=1 // pred_fallthru
      _
    %234 = sfence
    %235 = vsyncpa [#allocation4], 1

</llo_original>
